<compile_context>
chip_gen: v7x
topology: tpu7x:2x2x1
jax: 0.10.0
libtpu: 0.0.40
codegen_flags: <defaults>
</compile_context>

<pallas_src>
import functools

import jax
import jax.numpy as jnp
from jax.experimental import pallas as pl
from jax.experimental.pallas import tpu as pltpu


def _label_smooth_ce_kernel(x_ref, tgt_ref, out_ref, *, smoothing: float,
                            n_valid: int, tn: int, needs_mask: bool):
    confidence = 1.0 - smoothing
    i = pl.program_id(0)

    x = x_ref[...].astype(jnp.float32)          # (TN, C) f32, upcast in-register
    tgt = tgt_ref[...]                          # (TN, 1) int32
    c = x.shape[-1]

    # Numerically-stable row log-sum-exp; intermediates stay 2-D (TN, 1).
    m = jnp.max(x, axis=-1, keepdims=True)
    lse = jnp.log(jnp.sum(jnp.exp(x - m), axis=-1, keepdims=True))
    logz = m + lse                               # (TN, 1)

    # Fused gather + mean: loss = logZ - sum_j x_j * w_j with
    #   w_j = smoothing/C + confidence * [j == target]   (select of constants).
    col = jax.lax.broadcasted_iota(jnp.int32, x.shape, 1)
    w_hit = jnp.float32(confidence + smoothing / c)
    w_miss = jnp.float32(smoothing / c)
    w = jnp.where(col == tgt, w_hit, w_miss)
    loss = logz - jnp.sum(x * w, axis=-1, keepdims=True)   # (TN, 1)

    def _store(vals):
        s = jnp.sum(vals, axis=0, keepdims=True)           # (1, 1)
        out_ref[...] = jnp.broadcast_to(s, (1, 128))        # lane-dense slab

    if needs_mask:
        # Only the last tile can contain rows past the true batch size.
        is_last = i == pl.num_programs(0) - 1

        @pl.when(is_last)
        def _():
            row = i * tn + jax.lax.broadcasted_iota(jnp.int32, (tn, 1), 0)
            _store(jnp.where(row < n_valid, loss, 0.0))

        @pl.when(jnp.logical_not(is_last))
        def _():
            _store(loss)
    else:
        _store(loss)


def _vmem_capacity_bytes() -> int:
    try:
        return int(pltpu.get_tpu_info().vmem_capacity_bytes)
    except Exception:
        return 64 * 1024 * 1024     # conservative (v7x per-TC VMEM)


def label_smooth_ce(x: jax.Array, target: jax.Array, smoothing: float = 0.1,
                    *, block_rows: int | None = None) -> jax.Array:
    """x: (N, C) float (f32/bf16), target: (N,) int. Returns scalar f32 loss."""
    n, c = x.shape
    in_bytes = x.dtype.itemsize
    sub = 16 if in_bytes <= 2 else 8            # bf16 packs 16 sublanes / vreg

    vmem_cap = _vmem_capacity_bytes()
    vmem_limit = min(vmem_cap // 2, 64 * 1024 * 1024)

    if block_rows is None:
        # Honest live-VMEM accounting per row of the tile:
        #   2x double-buffered input + ~3x f32 temporaries (upcast, exp, w*x).
        per_row = c * (2 * in_bytes + 3 * 4)
        budget = min(vmem_cap // 3, 24 * 1024 * 1024)
        block_rows = max(sub, budget // max(1, per_row))

    tn = max(sub, (min(int(block_rows), 4096) // sub) * sub)
    if tn >= n:
        tn = n                                  # single full-extent block
    num_tiles = (n + tn - 1) // tn
    needs_mask = (n % tn) != 0

    tgt2d = target.astype(jnp.int32).reshape(n, 1)

    kernel = functools.partial(_label_smooth_ce_kernel,
                               smoothing=float(smoothing), n_valid=n, tn=tn,
                               needs_mask=needs_mask)

    partials = pl.pallas_call(
        kernel,
        out_shape=jax.ShapeDtypeStruct((1, num_tiles * 128), jnp.float32),
        grid_spec=pltpu.PrefetchScalarGridSpec(
            num_scalar_prefetch=0,
            grid=(num_tiles,),
            in_specs=[
                pl.BlockSpec((tn, c), lambda i: (i, 0)),
                pl.BlockSpec((tn, 1), lambda i: (i, 0)),
            ],
            out_specs=pl.BlockSpec((1, 128), lambda i: (0, i)),
        ),
        compiler_params=pltpu.CompilerParams(
            dimension_semantics=("parallel",),
            vmem_limit_bytes=vmem_limit,
        ),
    )(x, tgt2d)

    # Each 128-lane slab holds one tile's partial sum (replicated); take lane 0.
    tile_sums = partials.reshape(num_tiles, 128)[:, 0]
    return jnp.sum(tile_sums) / n


def _reference(x, target, smoothing=0.1):
    confidence = 1.0 - smoothing
    logprobs = jax.nn.log_softmax(x.astype(jnp.float32), axis=-1)
    nll = -jnp.take_along_axis(logprobs, target[:, None].astype(jnp.int32),
                               axis=-1)[:, 0]
    smooth = -jnp.mean(logprobs, axis=-1)
    return jnp.mean(confidence * nll + smoothing * smooth)


if __name__ == "__main__":
    key = jax.random.PRNGKey(0)
    kx, kt, kx2, kt2 = jax.random.split(key, 4)

    # Small shape consistent with the module's forward: (batch, classes).
    N, C = 8, 16
    x = jax.random.normal(kx, (N, C), dtype=jnp.float32)
    target = jax.random.randint(kt, (N,), 0, C, dtype=jnp.int32)

    loss = jax.block_until_ready(label_smooth_ce(x, target, smoothing=0.1))
    ref = _reference(x, target, smoothing=0.1)
    assert jnp.allclose(loss, ref, atol=1e-4, rtol=1e-4), (loss, ref)

    # Larger, non-aligned shape exercising a multi-tile grid with a partial
    # (masked) last tile and bf16 logits streamed through the pallas_call
    # boundary — no wrapper-side padding of the logits.
    N2, C2 = 200, 384
    x2 = jax.random.normal(kx2, (N2, C2), dtype=jnp.float32).astype(jnp.bfloat16)
    target2 = jax.random.randint(kt2, (N2,), 0, C2, dtype=jnp.int32)

    loss2 = jax.block_until_ready(
        label_smooth_ce(x2, target2, smoothing=0.1, block_rows=64))
    ref2 = _reference(x2, target2, smoothing=0.1)
    assert jnp.allclose(loss2, ref2, atol=1e-3, rtol=1e-3), (loss2, ref2)

    print("KERNEL_OK")
</pallas_src>

<mosaic_0001>
module attributes {stable_mosaic.version = 11 : i64} {
  func.func @_label_smooth_ce_kernel(%arg0: i32, %arg1: memref<8x16xf32, #tpu.memory_space<vmem>>, %arg2: memref<8x1xi32, #tpu.memory_space<vmem>>, %arg3: memref<1x128xf32, #tpu.memory_space<vmem>>) attributes {dimension_semantics = [#tpu.dimension_semantics<parallel>], iteration_bounds = array<i64: 1>, scalar_prefetch = 0 : i64, scratch_operands = 0 : i64, tpu.core_type = #tpu.core_type<tc>, window_params = [{transform_indices = @transform_0, window_bounds = array<i64: 8, 16>}, {transform_indices = @transform_1, window_bounds = array<i64: 8, 1>}, {transform_indices = @transform_2, window_bounds = array<i64: 1, 128>}]} {
    %c0 = arith.constant 0 : index
    %c0_0 = arith.constant 0 : index
    %0 = vector.load %arg1[%c0, %c0_0] : memref<8x16xf32, #tpu.memory_space<vmem>>, vector<8x16xf32>
    %c0_1 = arith.constant 0 : index
    %c0_2 = arith.constant 0 : index
    %1 = vector.load %arg2[%c0_1, %c0_2] : memref<8x1xi32, #tpu.memory_space<vmem>>, vector<8x1xi32>
    %cst = arith.constant dense<0xFF800000> : vector<8xf32>
    %2 = vector.multi_reduction <maximumf>, %0, %cst [1] : vector<8x16xf32> to vector<8xf32>
    %3 = vector.shape_cast %2 : vector<8xf32> to vector<8x1xf32>
    %4 = vector.broadcast %3 : vector<8x1xf32> to vector<8x16xf32>
    %5 = arith.subf %0, %4 : vector<8x16xf32>
    %6 = math.exp %5 : vector<8x16xf32>
    %cst_3 = arith.constant dense<0.000000e+00> : vector<8xf32>
    %7 = vector.multi_reduction <add>, %6, %cst_3 [1] : vector<8x16xf32> to vector<8xf32>
    %8 = vector.shape_cast %7 : vector<8xf32> to vector<8x1xf32>
    %9 = math.log %8 : vector<8x1xf32>
    %10 = arith.addf %3, %9 : vector<8x1xf32>
    %11 = tpu.iota {dimensions = array<i32: 1>} : vector<8x16xi32>
    %12 = vector.broadcast %1 : vector<8x1xi32> to vector<8x16xi32>
    %13 = arith.cmpi eq, %11, %12 : vector<8x16xi32>
    %cst_4 = arith.constant 9.062500e-01 : f32
    %cst_5 = arith.constant 6.250000e-03 : f32
    %14 = vector.broadcast %cst_4 : f32 to vector<8x16xf32>
    %15 = vector.broadcast %cst_5 : f32 to vector<8x16xf32>
    %16 = arith.select %13, %14, %15 : vector<8x16xi1>, vector<8x16xf32>
    %17 = arith.mulf %0, %16 : vector<8x16xf32>
    %cst_6 = arith.constant dense<0.000000e+00> : vector<8xf32>
    %18 = vector.multi_reduction <add>, %17, %cst_6 [1] : vector<8x16xf32> to vector<8xf32>
    %19 = vector.shape_cast %18 : vector<8xf32> to vector<8x1xf32>
    %20 = arith.subf %10, %19 : vector<8x1xf32>
    %cst_7 = arith.constant dense<0.000000e+00> : vector<1xf32>
    %21 = vector.multi_reduction <add>, %20, %cst_7 [0] : vector<8x1xf32> to vector<1xf32>
    %22 = vector.shape_cast %21 : vector<1xf32> to vector<1x1xf32>
    %23 = vector.shape_cast %22 : vector<1x1xf32> to vector<1x1xf32>
    %24 = vector.broadcast %23 : vector<1x1xf32> to vector<1x128xf32>
    %c0_8 = arith.constant 0 : index
    %c0_9 = arith.constant 0 : index
    %25 = vector.load %arg3[%c0_8, %c0_9] : memref<1x128xf32, #tpu.memory_space<vmem>>, vector<1x128xf32>
    tpu.vector_store %arg3[%c0_8, %c0_9], %24 {strides = array<i32>} : memref<1x128xf32, #tpu.memory_space<vmem>>, vector<1x128xf32>,
    return
  }
  func.func @transform_0(%arg0: i32) -> (i32, i32) {
    %c0_i32 = arith.constant 0 : i32
    %c0_i32_0 = arith.constant 0 : i32
    return %arg0, %c0_i32 : i32, i32
  }
  func.func @transform_1(%arg0: i32) -> (i32, i32) {
    %c0_i32 = arith.constant 0 : i32
    %c0_i32_0 = arith.constant 0 : i32
    return %arg0, %c0_i32 : i32, i32
  }
  func.func @transform_2(%arg0: i32) -> (i32, i32) {
    %c0_i32 = arith.constant 0 : i32
    %c0_i32_0 = arith.constant 0 : i32
    return %c0_i32, %arg0 : i32, i32
  }
}

</mosaic_0001>

<llo_original>
// kernel: tpu_custom_call.1
$region0: #{tpu_custom_call.1}
  #allocation0 [shape = 'u32[]', space=smem, size = 0x4, offset = 0x4, fixed_abs, tag = 'smem constant byte address 0x4 - core index']
  #allocation1 [shape = 'u32[144,128]{1,0:T(1,128)}', space=vmem, size = 0x12000, scoped, tag = 'internal scratch']
  %s0 = inlined_call_operand.vmem [shape: f32[8,16], index: 0, kind: input, shape index: {}]
  %s1 = inlined_call_operand.vmem [shape: s32[8,1], index: 1, kind: input, shape index: {}]
  %s2 = inlined_call_operand.hbm [shape: f32[1,128], index: 2, kind: output, shape index: {}]
  %s3 = sld [smem:[#allocation0]]
  $region18: #{tpu_custom_call.1} parent=0
    _
  %s5 = ssub.s32 1, %s3
  %s6 = scalar_select 0, %s5, %s3
  $region1: #{tpu_custom_call.1} parent=0
    #allocation2 [shape = 'u8[512]{0}', space=vmem, size = 0x400, scoped, tag = 'output window, operand 0, single buffered']
    #allocation3 [shape = 's32[1]{0}', space=sflag, size = 0x4, scoped, tag = 'scoped memory for tpu_custom_call.1']
    %7 = vsyncpa [#allocation3], 0
    // Predicated region
    $region2: #{tpu_custom_call.1} parent=1 // pred_check
      _
    $region3: #{tpu_custom_call.1} parent=1 // pred_check_branch
      %9 = sbr.rel (0) target = $region5
    $region4: #{tpu_custom_call.1} parent=1 // pred_region
      _
    $region5: #{tpu_custom_call.1} parent=1 // pred_fallthru
      _
    // Predicated region
    $region6: #{tpu_custom_call.1} parent=1 // pred_check
      _
    $region7: #{tpu_custom_call.1} parent=1 // pred_check_branch
      %11 = sbr.rel (0) target = $region9
    $region8: #{tpu_custom_call.1} parent=1 // pred_region
      _
    $region9: #{tpu_custom_call.1} parent=1 // pred_fallthru
      _
    %v12 = vld [vmem:[%s0] sm:$0xff]
    %v13 = vld [vmem:[%s1] sm:$0xff]
    %vm14 = vcmask 130048
    %v15 = vsel %vm14, %v12, -inf
    %16 = vmax.xlane.f32.xlu0 %v15
    %v17 = vpop.xlane.xlu0 %16
    %v18 = vsub.f32 %v12, %v17
    %v19 = vmul.f32 %v18, 1.442695
    %v20 = vpow.pop %v19
    %v21 = vsel %vm14, %v20, 0.0
    %22 = vadd.xlane.f32.xlu0 %v21
    %v23 = vpop.xlane.xlu0 %22
    %v24 = vlog2.pop %v23
    %v25 = vmul.f32 %v24, 0.6931472
    %v26 = vadd.f32 %v17, %v25
    %v27 = vlaneseq
    %v28 = vand.u32 %v27, 127
    %29 = vset.pattern.permute.xlu0 0
    %30 = vperm.xlu0 %29, %v13
    %v31 = vpop.permute.xlu0 %30
    %vm32 = vcmp.eq.s32.totalorder %v28, %v31
    %v33 = vsel %vm32, 0.90625, 0.00625
    %v34 = vmul.f32 %v12, %v33
    %v35 = vsel %vm14, %v34, 0.0
    %36 = vadd.xlane.f32.xlu0 %v35
    %v37 = vpop.xlane.xlu0 %36
    %v38 = vsub.f32 %v26, %v37
    %v39 = vrot.slane %v38, 4
    %v40 = vadd.f32 %v38, %v39
    %v41 = vrot.slane %v40, 2
    %v42 = vadd.f32 %v40, %v41
    %v43 = vrot.slane %v42, 1
    %v44 = vadd.f32 %v42, %v43
    %45 = vst [vmem:[#allocation2] sm:$0x1] %v44
    // Predicated region
    $region10: #{tpu_custom_call.1} parent=1 // pred_check
      _
    $region11: #{tpu_custom_call.1} parent=1 // pred_check_branch
      %47 = sbr.rel (0) target = $region13
    $region12: #{tpu_custom_call.1} parent=1 // pred_region
      %s49 = ssub.s32 16, 16
      %50 = vsyncadd [#allocation3], %s49
      %s52 = sshll.u32 [#allocation2], 4
      %s53 = int_to_ptr.vmem [resolvable:$true] %s52
      %55 = dma.vmem_to_hbm [thread:$0]  %s53, 16, %s2, [#allocation3]
    $region13: #{tpu_custom_call.1} parent=1 // pred_fallthru
      _
    // Predicated region
    $region14: #{tpu_custom_call.1} parent=1 // pred_check
      _
    $region15: #{tpu_custom_call.1} parent=1 // pred_check_branch
      %57 = sbr.rel (0) target = $region17
    $region16: #{tpu_custom_call.1} parent=1 // pred_region
      %58 = dma.done [#allocation3], 16
    $region17: #{tpu_custom_call.1} parent=1 // pred_fallthru
      _
    %59 = vsyncpa [#allocation3], 1

</llo_original>
